<compile_context>
chip_gen: v6e
topology: v6e:2x2x1
jax: 0.10.0
libtpu: 0.0.40
codegen_flags: <defaults>
</compile_context>

<pallas_src>
import math

import jax
import jax.numpy as jnp
from jax.experimental import pallas as pl
from jax.experimental.pallas import tpu as pltpu


def _round_up(x, m):
    return ((x + m - 1) // m) * m


def _pick_tile(m_pad, cap, lane=128):
    """Largest multiple of `lane` that divides m_pad, capped at `cap`."""
    t = min(cap, m_pad)
    t = (t // lane) * lane
    while m_pad % t:
        t -= lane
    return t


# ---------------------------------------------------------------------------
# Kernel 1: support = X @ W  (row-tiled; output stored bf16 for streaming)
# ---------------------------------------------------------------------------
def _support_kernel(x_ref, w_ref, s_ref):
    s_ref[...] = jnp.dot(
        x_ref[...], w_ref[...], preferred_element_type=jnp.float32
    ).astype(s_ref.dtype)


# ---------------------------------------------------------------------------
# Kernel 2: out = adj @ support + bias  (2-D tiled, k-reduction, f32 accumulator)
# ---------------------------------------------------------------------------
def _aggregate_kernel(adj_ref, s_ref, b_ref, o_ref, acc_ref):
    k = pl.program_id(1)

    @pl.when(k == 0)
    def _():
        acc_ref[...] = jnp.zeros_like(acc_ref)

    acc_ref[...] += jnp.dot(
        adj_ref[...], s_ref[...], preferred_element_type=jnp.float32
    )

    @pl.when(k == pl.num_programs(1) - 1)
    def _():
        o_ref[...] = (acc_ref[...] + b_ref[...]).astype(o_ref.dtype)


def graph_convolution(x_nchw, adj, weight, bias):
    """Fused GCN forward: adj @ (permute(x) @ W) + b, returned in NCHW layout."""
    N, C, H, W = x_nchw.shape
    M = N * H * W
    assert adj.shape == (M, M)
    assert weight.shape == (C, C)

    # --- Glue: NCHW -> (M, C); pad the node axis to a multiple of 128 --------
    x_flat = jnp.transpose(x_nchw, (0, 2, 3, 1)).reshape(M, C).astype(jnp.float32)
    M_pad = _round_up(M, 128)
    # Stream adj as bf16: the kernel is bound by adj HBM bytes, so halving them
    # ~halves wall clock; accumulation stays f32 inside the kernel. In a real
    # model the adjacency would be stored in bf16 once and reused.
    adj_bf16 = adj.astype(jnp.bfloat16)
    if M_pad != M:
        x_flat = jnp.pad(x_flat, ((0, M_pad - M), (0, 0)))
        adj_bf16 = jnp.pad(adj_bf16, ((0, M_pad - M), (0, M_pad - M)))
    bias2d = bias.reshape(1, C).astype(jnp.float32)
    weight_f32 = weight.astype(jnp.float32)

    # Lane-dense tiles (multiples of 128), as large as is useful.
    TM = _pick_tile(M_pad, 512)     # output row tile
    TK = _pick_tile(M_pad, 1024)    # reduction (adj column) tile

    # --- Kernel 1: support = X @ W -------------------------------------------
    support = pl.pallas_call(
        _support_kernel,
        out_shape=jax.ShapeDtypeStruct((M_pad, C), jnp.bfloat16),
        grid_spec=pltpu.PrefetchScalarGridSpec(
            num_scalar_prefetch=0,
            grid=(M_pad // TM,),
            in_specs=[
                pl.BlockSpec((TM, C), lambda i: (i, 0)),   # x rows
                pl.BlockSpec((C, C), lambda i: (0, 0)),    # weight (tiny, resident)
            ],
            out_specs=pl.BlockSpec((TM, C), lambda i: (i, 0)),
        ),
        compiler_params=pltpu.CompilerParams(
            dimension_semantics=("parallel",),
        ),
    )(x_flat, weight_f32)

    # --- Kernel 2: out = adj @ support + bias ---------------------------------
    cost = pl.CostEstimate(
        flops=2 * M_pad * M_pad * C,
        transcendentals=0,
        bytes_accessed=M_pad * M_pad * 2 + M_pad * C * (2 + 4) + C * 4,
    )
    out_flat = pl.pallas_call(
        _aggregate_kernel,
        out_shape=jax.ShapeDtypeStruct((M_pad, C), jnp.float32),
        grid_spec=pltpu.PrefetchScalarGridSpec(
            num_scalar_prefetch=0,
            grid=(M_pad // TM, M_pad // TK),
            in_specs=[
                pl.BlockSpec((TM, TK), lambda i, k: (i, k)),   # adj tile (bf16)
                pl.BlockSpec((TK, C), lambda i, k: (k, 0)),    # support tile (bf16)
                pl.BlockSpec((1, C), lambda i, k: (0, 0)),     # bias (f32)
            ],
            out_specs=pl.BlockSpec((TM, C), lambda i, k: (i, 0)),
            scratch_shapes=[pltpu.VMEM((TM, C), jnp.float32)],
        ),
        compiler_params=pltpu.CompilerParams(
            dimension_semantics=("parallel", "arbitrary"),
        ),
        cost_estimate=cost,
    )(adj_bf16, support, bias2d)

    # --- Glue: (M, C) -> NCHW --------------------------------------------------
    out_flat = out_flat[:M]
    return jnp.transpose(out_flat.reshape(N, H, W, C), (0, 3, 1, 2))


def _reference(x_nchw, adj, weight, bias):
    N, C, H, W = x_nchw.shape
    x_flat = jnp.transpose(x_nchw, (0, 2, 3, 1)).reshape(-1, C)
    support = x_flat @ weight
    out = adj.astype(jnp.float32) @ support + bias
    return jnp.transpose(out.reshape(N, H, W, C), (0, 3, 1, 2))


if __name__ == "__main__":
    # Small shapes: N=2, C=32 (in_features == out_features == C), H=W=8 -> M=128
    N, C, H, W = 2, 32, 8, 8
    M = N * H * W

    key = jax.random.PRNGKey(0)
    kx, ka, kw, kb = jax.random.split(key, 4)

    x = jax.random.normal(kx, (N, C, H, W), dtype=jnp.float32)
    # A simple symmetric row-normalized adjacency-like matrix.
    adj_raw = (jax.random.uniform(ka, (M, M)) > 0.9).astype(jnp.float32)
    adj = adj_raw + jnp.eye(M, dtype=jnp.float32)
    adj = adj / jnp.sum(adj, axis=1, keepdims=True)

    # Deterministic parameter init matching reset_parameters(): U(-stdv, stdv)
    stdv = 1.0 / math.sqrt(C)
    weight = jax.random.uniform(kw, (C, C), minval=-stdv, maxval=stdv, dtype=jnp.float32)
    bias = jax.random.uniform(kb, (C,), minval=-stdv, maxval=stdv, dtype=jnp.float32)

    out = graph_convolution(x, adj, weight, bias)
    out = jax.block_until_ready(out)

    ref = _reference(x, adj, weight, bias)
    assert out.shape == (N, C, H, W)
    # Tolerance loosened slightly for bf16-streamed adjacency (f32 accumulation).
    assert jnp.allclose(out, ref, atol=2e-2, rtol=2e-2), "mismatch vs reference"

    print("KERNEL_OK")
</pallas_src>

<mosaic_0001>
module attributes {stable_mosaic.version = 11 : i64} {
  func.func @_support_kernel(%arg0: i32, %arg1: memref<128x32xf32, #tpu.memory_space<vmem>>, %arg2: memref<32x32xf32, #tpu.memory_space<vmem>>, %arg3: memref<128x32xbf16, #tpu.memory_space<vmem>>) attributes {dimension_semantics = [#tpu.dimension_semantics<parallel>], iteration_bounds = array<i64: 1>, scalar_prefetch = 0 : i64, scratch_operands = 0 : i64, tpu.core_type = #tpu.core_type<tc>, window_params = [{transform_indices = @transform_0, window_bounds = array<i64: 128, 32>}, {pipeline_mode = #tpu.pipeline_mode<synchronous>, transform_indices = @transform_1, window_bounds = array<i64: 32, 32>}, {transform_indices = @transform_2, window_bounds = array<i64: 128, 32>}]} {
    %c0 = arith.constant 0 : index
    %c0_0 = arith.constant 0 : index
    %0 = vector.load %arg1[%c0, %c0_0] : memref<128x32xf32, #tpu.memory_space<vmem>>, vector<128x32xf32>
    %c0_1 = arith.constant 0 : index
    %c0_2 = arith.constant 0 : index
    %1 = vector.load %arg2[%c0_1, %c0_2] : memref<32x32xf32, #tpu.memory_space<vmem>>, vector<32x32xf32>
    %cst = arith.constant dense<0.000000e+00> : vector<128x32xf32>
    %2 = tpu.matmul %0, %1, %cst {dimension_numbers = #tpu.dot_dimension_numbers<[1], [0], [0], [1], [0, 0, 1, 1], [], []>} : vector<128x32xf32>, vector<32x32xf32>, vector<128x32xf32> -> vector<128x32xf32>
    %3 = arith.truncf %2 : vector<128x32xf32> to vector<128x32xbf16>
    %c0_3 = arith.constant 0 : index
    %c0_4 = arith.constant 0 : index
    %4 = vector.load %arg3[%c0_3, %c0_4] : memref<128x32xbf16, #tpu.memory_space<vmem>>, vector<128x32xbf16>
    tpu.vector_store %arg3[%c0_3, %c0_4], %3 {strides = array<i32>} : memref<128x32xbf16, #tpu.memory_space<vmem>>, vector<128x32xbf16>,
    return
  }
  func.func @transform_0(%arg0: i32) -> (i32, i32) {
    %c0_i32 = arith.constant 0 : i32
    %c0_i32_0 = arith.constant 0 : i32
    return %arg0, %c0_i32 : i32, i32
  }
  func.func @transform_1(%arg0: i32) -> (i32, i32) {
    %c0_i32 = arith.constant 0 : i32
    %c0_i32_0 = arith.constant 0 : i32
    %c0_i32_1 = arith.constant 0 : i32
    return %c0_i32, %c0_i32_0 : i32, i32
  }
  func.func @transform_2(%arg0: i32) -> (i32, i32) {
    %c0_i32 = arith.constant 0 : i32
    %c0_i32_0 = arith.constant 0 : i32
    return %arg0, %c0_i32 : i32, i32
  }
}

</mosaic_0001>

<llo_original>
// kernel: tpu_custom_call.1
$region0: #{tpu_custom_call.1}
  #allocation0 [shape = 'u32[]', space=smem, size = 0x4, offset = 0x4, fixed_abs, tag = 'smem constant byte address 0x4 - core index']
  #allocation1 [shape = 'u32[144,128]{1,0:T(1,128)}', space=vmem, size = 0x12000, scoped, tag = 'internal scratch']
  %s0 = inlined_call_operand.vmem [shape: f32[128,32], index: 0, kind: input, shape index: {}]
  %s1 = inlined_call_operand.vmem [shape: f32[32,32], index: 1, kind: input, shape index: {}]
  %s2 = inlined_call_operand.vmem [shape: bf16[128,32], index: 2, kind: output, shape index: {}]
  %s3 = sld [smem:[#allocation0]]
  $region18: #{tpu_custom_call.1} parent=0
    _
  %s5 = ssub.s32 1, %s3
  %s6 = scalar_select 0, %s5, %s3
  // Predicated region
  $region2: #{tpu_custom_call.1} parent=0 // pred_check
    _
  $region3: #{tpu_custom_call.1} parent=0 // pred_check_branch
    %8 = sbr.rel (0) target = $region5
  $region4: #{tpu_custom_call.1} parent=0 // pred_region
    _
  $region5: #{tpu_custom_call.1} parent=0 // pred_fallthru
    _
  // Predicated region
  $region6: #{tpu_custom_call.1} parent=0 // pred_check
    _
  $region7: #{tpu_custom_call.1} parent=0 // pred_check_branch
    %10 = sbr.rel (0) target = $region9
  $region8: #{tpu_custom_call.1} parent=0 // pred_region
    _
  $region9: #{tpu_custom_call.1} parent=0 // pred_fallthru
    _
  %v11 = vld [vmem:[%s0] sm:$0xff]
  %v12 = vld [vmem:[%s0 + $0x8] sm:$0xff]
  %v13 = vld [vmem:[%s0 + $0x10] sm:$0xff]
  %v14 = vld [vmem:[%s0 + $0x18] sm:$0xff]
  %v15 = vld [vmem:[%s0 + $0x20] sm:$0xff]
  %v16 = vld [vmem:[%s0 + $0x28] sm:$0xff]
  %v17 = vld [vmem:[%s0 + $0x30] sm:$0xff]
  %v18 = vld [vmem:[%s0 + $0x38] sm:$0xff]
  %v19 = vld [vmem:[%s0 + $0x40] sm:$0xff]
  %v20 = vld [vmem:[%s0 + $0x48] sm:$0xff]
  %v21 = vld [vmem:[%s0 + $0x50] sm:$0xff]
  %v22 = vld [vmem:[%s0 + $0x58] sm:$0xff]
  %v23 = vld [vmem:[%s0 + $0x60] sm:$0xff]
  %v24 = vld [vmem:[%s0 + $0x68] sm:$0xff]
  %v25 = vld [vmem:[%s0 + $0x70] sm:$0xff]
  %v26 = vld [vmem:[%s0 + $0x78] sm:$0xff]
  %v27 = vld [vmem:[%s1] sm:$0xff]
  %v28 = vld [vmem:[%s1 + $0x8] sm:$0xff]
  %v29 = vld [vmem:[%s1 + $0x10] sm:$0xff]
  %v30 = vld [vmem:[%s1 + $0x18] sm:$0xff]
  %vm31 = vcmask 261120
  %v33 = vsel %vm31, %v11, 0
  %v36 = vsel %vm31, %v12, 0
  %v39 = vsel %vm31, %v13, 0
  %v42 = vsel %vm31, %v14, 0
  %v45 = vsel %vm31, %v15, 0
  %v48 = vsel %vm31, %v16, 0
  %v51 = vsel %vm31, %v17, 0
  %v54 = vsel %vm31, %v18, 0
  %v57 = vsel %vm31, %v19, 0
  %v60 = vsel %vm31, %v20, 0
  %v63 = vsel %vm31, %v21, 0
  %v66 = vsel %vm31, %v22, 0
  %v69 = vsel %vm31, %v23, 0
  %v72 = vsel %vm31, %v24, 0
  %v75 = vsel %vm31, %v25, 0
  %v78 = vsel %vm31, %v26, 0
  %80 = vmatprep.subr.mxu0 0.0
  %81 = vmatpush1.msra.mxu0 0.0
  %82 = vmatprep.subr.mxu0 0.0
  %83 = vmatpush1.msra.mxu0 0.0
  %84 = vmatprep.subr.mxu0 0.0
  %85 = vmatpush1.msra.mxu0 0.0
  %86 = vmatprep.subr.mxu0 0.0
  %87 = vmatpush1.msra.mxu0 0.0
  %88 = vmatprep.subr.mxu0 0.0
  %89 = vmatpush1.msra.mxu0 0.0
  %90 = vmatprep.subr.mxu0 0.0
  %91 = vmatpush1.msra.mxu0 0.0
  %92 = vmatprep.subr.mxu0 0.0
  %93 = vmatpush1.msra.mxu0 0.0
  %94 = vmatprep.subr.mxu0 0.0
  %95 = vmatpush1.msra.mxu0 0.0
  %96 = vmatprep.subr.mxu0 0.0
  %97 = vmatpush1.msra.mxu0 0.0
  %98 = vmatprep.subr.mxu0 0.0
  %99 = vmatpush1.msra.mxu0 0.0
  %100 = vmatprep.subr.mxu0 0.0
  %101 = vmatpush1.msra.mxu0 0.0
  %102 = vmatprep.subr.mxu0 0.0
  %103 = vmatpush1.msra.mxu0 0.0
  %104 = vmatprep.subr.mxu0 0.0
  %105 = vmatpush1.msra.mxu0 %v30
  %106 = vmatprep.subr.mxu0 0.0
  %107 = vmatpush1.msra.mxu0 %v29
  %108 = vmatprep.subr.mxu0 0.0
  %109 = vmatpush1.msra.mxu0 %v28
  %110 = vmatprep.subr.mxu0 0.0
  %111 = vmatpush1.msra.mxu0 %v27
  %112 = vmatprep.subr.mxu0 0.0
  %113 = vmatpush2.msra.mxu0 0.0
  %114 = vmatprep.subr.mxu0 0.0
  %115 = vmatpush2.msra.mxu0 0.0
  %116 = vmatprep.subr.mxu0 0.0
  %117 = vmatpush2.msra.mxu0 0.0
  %118 = vmatprep.subr.mxu0 0.0
  %119 = vmatpush2.msra.mxu0 0.0
  %120 = vmatprep.subr.mxu0 0.0
  %121 = vmatpush2.msra.mxu0 0.0
  %122 = vmatprep.subr.mxu0 0.0
  %123 = vmatpush2.msra.mxu0 0.0
  %124 = vmatprep.subr.mxu0 0.0
  %125 = vmatpush2.msra.mxu0 0.0
  %126 = vmatprep.subr.mxu0 0.0
  %127 = vmatpush2.msra.mxu0 0.0
  %128 = vmatprep.subr.mxu0 0.0
  %129 = vmatpush2.msra.mxu0 0.0
  %130 = vmatprep.subr.mxu0 0.0
  %131 = vmatpush2.msra.mxu0 0.0
  %132 = vmatprep.subr.mxu0 0.0
  %133 = vmatpush2.msra.mxu0 0.0
  %134 = vmatprep.subr.mxu0 0.0
  %135 = vmatpush2.msra.mxu0 0.0
  %136 = vmatprep.subr.mxu0 0.0
  %137 = vmatpush2.msra.mxu0 0.0
  %138 = vmatprep.subr.mxu0 0.0
  %139 = vmatpush2.msra.mxu0 0.0
  %140 = vmatprep.subr.mxu0 0.0
  %141 = vmatpush2.msra.mxu0 0.0
  %142 = vmatprep.subr.mxu0 0.0
  %143 = vmatpush2.msra.mxu0 0.0
  %144 = vmatprep.mubr.f32.mxu0 0.0
  %145 = vmatmul.mubr.f32.gmra.mxu0 %v33
  %v146 = vpop.f32.mrf.mxu0
  %v147 = vadd.f32 0.0, %v146
  %v148 = vpop.f32.mrf.mxu0
  %149 = vmatprep.mubr.f32.mxu0 0.0
  %150 = vmatmul.mubr.f32.gmra.mxu0 %v36
  %v151 = vpop.f32.mrf.mxu0
  %v152 = vadd.f32 0.0, %v151
  %v153 = vpop.f32.mrf.mxu0
  %154 = vmatprep.mubr.f32.mxu0 0.0
  %155 = vmatmul.mubr.f32.gmra.mxu0 %v39
  %v156 = vpop.f32.mrf.mxu0
  %v157 = vadd.f32 0.0, %v156
  %v158 = vpop.f32.mrf.mxu0
  %159 = vmatprep.mubr.f32.mxu0 0.0
  %160 = vmatmul.mubr.f32.gmra.mxu0 %v42
  %v161 = vpop.f32.mrf.mxu0
  %v162 = vadd.f32 0.0, %v161
  %v163 = vpop.f32.mrf.mxu0
  %164 = vmatprep.mubr.f32.mxu0 0.0
  %165 = vmatmul.mubr.f32.gmra.mxu0 %v45
  %v166 = vpop.f32.mrf.mxu0
  %v167 = vadd.f32 0.0, %v166
  %v168 = vpop.f32.mrf.mxu0
  %169 = vmatprep.mubr.f32.mxu0 0.0
  %170 = vmatmul.mubr.f32.gmra.mxu0 %v48
  %v171 = vpop.f32.mrf.mxu0
  %v172 = vadd.f32 0.0, %v171
  %v173 = vpop.f32.mrf.mxu0
  %174 = vmatprep.mubr.f32.mxu0 0.0
  %175 = vmatmul.mubr.f32.gmra.mxu0 %v51
  %v176 = vpop.f32.mrf.mxu0
  %v177 = vadd.f32 0.0, %v176
  %v178 = vpop.f32.mrf.mxu0
  %179 = vmatprep.mubr.f32.mxu0 0.0
  %180 = vmatmul.mubr.f32.gmra.mxu0 %v54
  %v181 = vpop.f32.mrf.mxu0
  %v182 = vadd.f32 0.0, %v181
  %v183 = vpop.f32.mrf.mxu0
  %184 = vmatprep.mubr.f32.mxu0 0.0
  %185 = vmatmul.mubr.f32.gmra.mxu0 %v57
  %v186 = vpop.f32.mrf.mxu0
  %v187 = vadd.f32 0.0, %v186
  %v188 = vpop.f32.mrf.mxu0
  %189 = vmatprep.mubr.f32.mxu0 0.0
  %190 = vmatmul.mubr.f32.gmra.mxu0 %v60
  %v191 = vpop.f32.mrf.mxu0
  %v192 = vadd.f32 0.0, %v191
  %v193 = vpop.f32.mrf.mxu0
  %194 = vmatprep.mubr.f32.mxu0 0.0
  %195 = vmatmul.mubr.f32.gmra.mxu0 %v63
  %v196 = vpop.f32.mrf.mxu0
  %v197 = vadd.f32 0.0, %v196
  %v198 = vpop.f32.mrf.mxu0
  %199 = vmatprep.mubr.f32.mxu0 0.0
  %200 = vmatmul.mubr.f32.gmra.mxu0 %v66
  %v201 = vpop.f32.mrf.mxu0
  %v202 = vadd.f32 0.0, %v201
  %v203 = vpop.f32.mrf.mxu0
  %204 = vmatprep.mubr.f32.mxu0 0.0
  %205 = vmatmul.mubr.f32.gmra.mxu0 %v69
  %v206 = vpop.f32.mrf.mxu0
  %v207 = vadd.f32 0.0, %v206
  %v208 = vpop.f32.mrf.mxu0
  %209 = vmatprep.mubr.f32.mxu0 0.0
  %210 = vmatmul.mubr.f32.gmra.mxu0 %v72
  %v211 = vpop.f32.mrf.mxu0
  %v212 = vadd.f32 0.0, %v211
  %v213 = vpop.f32.mrf.mxu0
  %214 = vmatprep.mubr.f32.mxu0 0.0
  %215 = vmatmul.mubr.f32.gmra.mxu0 %v75
  %v216 = vpop.f32.mrf.mxu0
  %v217 = vadd.f32 0.0, %v216
  %v218 = vpop.f32.mrf.mxu0
  %219 = vmatprep.mubr.f32.mxu0 0.0
  %220 = vmatmul.mubr.f32.gmra.mxu0 %v78
  %v221 = vpop.f32.mrf.mxu0
  %v222 = vadd.f32 0.0, %v221
  %v223 = vpop.f32.mrf.mxu0
  %224 = vdwg.mxu0
  %v225 = vpack.c.bf16 %v152, %v147
  %v226 = vpack.c.bf16 %v162, %v157
  %v227 = vpack.c.bf16 %v172, %v167
  %v228 = vpack.c.bf16 %v182, %v177
  %v229 = vpack.c.bf16 %v192, %v187
  %v230 = vpack.c.bf16 %v202, %v197
  %v231 = vpack.c.bf16 %v212, %v207
  %v232 = vpack.c.bf16 %v222, %v217
  %v241 = vunpack.c.l.b16 %v225
  %v242 = vunpack.c.h.b16 %v225
  %v243 = vunpack.c.l.b16 %v226
  %v244 = vunpack.c.h.b16 %v226
  %v245 = vunpack.c.l.b16 %v227
  %v246 = vunpack.c.h.b16 %v227
  %v247 = vunpack.c.l.b16 %v228
  %v248 = vunpack.c.h.b16 %v228
  %v249 = vunpack.c.l.b16 %v229
  %v250 = vunpack.c.h.b16 %v229
  %v251 = vunpack.c.l.b16 %v230
  %v252 = vunpack.c.h.b16 %v230
  %v253 = vunpack.c.l.b16 %v231
  %v254 = vunpack.c.h.b16 %v231
  %v255 = vunpack.c.l.b16 %v232
  %v256 = vunpack.c.h.b16 %v232
  %v257 = vpack.c.b16 %v241, %v241
  %v258 = vpack.c.b16 %v242, %v242
  %v259 = vpack.c.b16 %v243, %v243
  %v260 = vpack.c.b16 %v244, %v244
  %v261 = vpack.c.b16 %v245, %v245
  %v262 = vpack.c.b16 %v246, %v246
  %v263 = vpack.c.b16 %v247, %v247
  %v264 = vpack.c.b16 %v248, %v248
  %v265 = vpack.c.b16 %v249, %v249
  %v266 = vpack.c.b16 %v250, %v250
  %v267 = vpack.c.b16 %v251, %v251
  %v268 = vpack.c.b16 %v252, %v252
  %v269 = vpack.c.b16 %v253, %v253
  %v270 = vpack.c.b16 %v254, %v254
  %v271 = vpack.c.b16 %v255, %v255
  %v272 = vpack.c.b16 %v256, %v256
  %vm289 = vcmask 257024
  %290 = vst.msk [vmem:[%s2] sm:$0xf] %vm289, %v257
  %291 = vst.msk [vmem:[%s2 + $0x4] sm:$0xf] %vm289, %v258
  %292 = vst.msk [vmem:[%s2 + $0x8] sm:$0xf] %vm289, %v259
  %293 = vst.msk [vmem:[%s2 + $0xc] sm:$0xf] %vm289, %v260
  %294 = vst.msk [vmem:[%s2 + $0x10] sm:$0xf] %vm289, %v261
  %295 = vst.msk [vmem:[%s2 + $0x14] sm:$0xf] %vm289, %v262
  %296 = vst.msk [vmem:[%s2 + $0x18] sm:$0xf] %vm289, %v263
  %297 = vst.msk [vmem:[%s2 + $0x1c] sm:$0xf] %vm289, %v264
  %298 = vst.msk [vmem:[%s2 + $0x20] sm:$0xf] %vm289, %v265
  %299 = vst.msk [vmem:[%s2 + $0x24] sm:$0xf] %vm289, %v266
  %300 = vst.msk [vmem:[%s2 + $0x28] sm:$0xf] %vm289, %v267
  %301 = vst.msk [vmem:[%s2 + $0x2c] sm:$0xf] %vm289, %v268
  %302 = vst.msk [vmem:[%s2 + $0x30] sm:$0xf] %vm289, %v269
  %303 = vst.msk [vmem:[%s2 + $0x34] sm:$0xf] %vm289, %v270
  %304 = vst.msk [vmem:[%s2 + $0x38] sm:$0xf] %vm289, %v271
  %305 = vst.msk [vmem:[%s2 + $0x3c] sm:$0xf] %vm289, %v272
  // Predicated region
  $region10: #{tpu_custom_call.1} parent=0 // pred_check
    _
  $region11: #{tpu_custom_call.1} parent=0 // pred_check_branch
    %307 = sbr.rel (0) target = $region13
  $region12: #{tpu_custom_call.1} parent=0 // pred_region
    _
  $region13: #{tpu_custom_call.1} parent=0 // pred_fallthru
    _
  // Predicated region
  $region14: #{tpu_custom_call.1} parent=0 // pred_check
    _
  $region15: #{tpu_custom_call.1} parent=0 // pred_check_branch
    %309 = sbr.rel (0) target = $region17
  $region16: #{tpu_custom_call.1} parent=0 // pred_region
    _
  $region17: #{tpu_custom_call.1} parent=0 // pred_fallthru
    _

</llo_original>
